<compile_context>
chip_gen: v7x
topology: tpu7x:2x2x1
jax: 0.10.0
libtpu: 0.0.40
codegen_flags: <defaults>
</compile_context>

<pallas_src>
import math
from functools import partial

import numpy as np
import jax
import jax.numpy as jnp
from jax import lax
from jax.experimental import pallas as pl
from jax.experimental.pallas import tpu as pltpu

BN_EPS = 1e-5
NEG_FILL = -1.0e30  # stands in for -inf padding of MaxPool1d


def bn_fold(gamma, beta, rmean, rvar, eps=BN_EPS):
    scale = gamma / jnp.sqrt(rvar + eps)
    shift = beta - rmean * scale
    return scale, shift


# ------------------------------ Pallas kernel -------------------------------

def _make_inception_kernel(C_in, C_pad, Pb, L):
    """One grid step = B_TILE batch elements, packed along lanes in VMEM."""
    kmax = 2 * Pb + 1

    def kernel(x_ref, m_ref, w_ref, sh_ref, o_ref):
        B = x_ref.shape[0]
        W = B * L

        # ---- pack batch along lanes: (C_in, B*L); per-b slabs are whole ----
        # ---- length-L lane segments, so this is chunk-aligned copies     ----
        xb3 = x_ref[...]                                         # (B, C_in, L)
        xp = jnp.concatenate([xb3[b] for b in range(B)], axis=-1)  # (C_in, W)
        if C_pad > C_in:
            xp = jnp.concatenate(
                [xp, jnp.zeros((C_pad - C_in, W), xp.dtype)], axis=0)  # (C_pad, W)

        masks = m_ref[...]                                       # (kmax+2, W)

        # ---- im2col via lane rotation + precomputed masks ----
        views = []
        mp_lo = None
        mp_hi = None
        for d in range(kmax):
            s = d - Pb                                           # tap shift
            if s == 0:
                v = xp                                           # always valid
            else:
                rolled = pltpu.roll(xp, (-s) % W, axis=1)        # v[:,q]=x[:,q+s]
                v = rolled * masks[d:d + 1, :]                   # zero-pad conv
            views.append(v)
            # reuse the +/-1 shifted views for the maxpool branch (-inf pad)
            if s == -1:
                mp_lo = v + masks[kmax:kmax + 1, :]
            elif s == 1:
                mp_hi = v + masks[kmax + 1:kmax + 2, :]
        mp = jnp.maximum(jnp.maximum(mp_lo, xp), mp_hi)          # MaxPool1d(3,1,1)

        stacked = jnp.concatenate(views + [mp], axis=0)          # (K_pad, W) f32

        # single wide-K MXU matmul (bf16 operands, f32 accumulation); output
        # rows are already in concatenated-channel order
        y = jnp.dot(w_ref[...], stacked.astype(jnp.bfloat16),
                    preferred_element_type=jnp.float32)          # (C_out, W)
        y = jnp.maximum(y + sh_ref[...], 0.0)                    # folded BN + ReLU

        # ---- scatter back to the natural (B, C_out, L) layout; each slice ----
        # ---- is a whole lane-segment, each store a full-vreg major write  ----
        for b in range(B):
            o_ref[b] = y[:, b * L:(b + 1) * L].astype(o_ref.dtype)

    return kernel


# ------------------------------ host helpers --------------------------------

def _pick_vmem_limit():
    # Budget against the chip's real VMEM (v5e/v6e: 128 MiB, v7x: 64 MiB)
    # instead of the small scoped default (16/32 MiB).
    try:
        cap = int(pltpu.get_tpu_info().vmem_capacity_bytes)
    except Exception:
        cap = 64 << 20  # conservative fallback that is safe on every chip
    return int(min(cap * 3 // 4, 100 << 20))


def _choose_batch_tile(N, L, bytes_per_lane, vmem_budget,
                       max_lanes=32768, max_btile=128):
    """Fewest grid steps whose per-step footprint fits the VMEM budget."""
    b0 = math.lcm(L, 128) // L            # min tile with 128-aligned lane width
    lanes = min(max(vmem_budget // bytes_per_lane, b0 * L), max_lanes)
    bt = min(max(lanes // L, b0), max_btile)
    bt = max((bt // b0) * b0, b0)
    n_aligned = -(-N // b0) * b0
    return min(bt, n_aligned)


def _build_masks_np(L, Pb, B_TILE):
    """Per-shift validity masks, identical for every grid step (numpy consts).

    rows 0..kmax-1 : multiplicative 0/1 mask for conv shift s = d - Pb
    row  kmax      : additive 0 / NEG_FILL mask for maxpool shift -1
    row  kmax+1    : additive 0 / NEG_FILL mask for maxpool shift +1
    """
    kmax = 2 * Pb + 1
    W = B_TILE * L
    pos = np.arange(W, dtype=np.int64) % L
    m = np.ones((kmax + 2, W), dtype=np.float32)
    for d in range(kmax):
        s = d - Pb
        m[d] = ((pos + s >= 0) & (pos + s < L)).astype(np.float32)
    m[kmax] = np.where(m[Pb - 1] > 0, 0.0, NEG_FILL).astype(np.float32)
    m[kmax + 1] = np.where(m[Pb + 1] > 0, 0.0, NEG_FILL).astype(np.float32)
    return m


def _build_fused_weights(blk, kss, F, C_in, C_pad, Pb):
    """Compose bottleneck into branch weights, fold BN scale, stack all taps
    and the maxpool 1x1 conv into one (C_out, (kmax+1)*C_pad) bf16 matrix with
    8-sublane-aligned channel slots."""
    kmax = 2 * Pb + 1
    C_out = (len(kss) + 1) * F

    if blk['wb'] is not None:
        wb2 = blk['wb'][:, :, 0]                               # (Bot, C_in)
    else:
        wb2 = jnp.eye(C_in, dtype=jnp.float32)                 # bottleneck_size == 0

    zero_slot = jnp.zeros((F, C_pad), jnp.float32)
    pad_cols = (jnp.zeros((F, C_pad - C_in), jnp.float32)
                if C_pad > C_in else None)

    def pad_slot(w_fc):                                        # (F, C_in) -> (F, C_pad)
        return jnp.concatenate([w_fc, pad_cols], axis=1) if pad_cols is not None else w_fc

    rows = []
    for i, ks in enumerate(kss):
        p_i = (ks - 1) // 2
        # exact composition: (branch conv) o (bottleneck 1x1), no BN/act between
        comp = jnp.einsum('fbt,bc->tfc', blk['wbr'][i], wb2)   # (ks, F, C_in)
        slots = []
        for d in range(kmax):
            t = d - (Pb - p_i)
            slots.append(pad_slot(comp[t]) if 0 <= t < ks else zero_slot)
        slots.append(zero_slot)                                # maxpool slot
        rows.append(jnp.concatenate(slots, axis=1))
    # maxpool branch: its 1x1 conv occupies the last slot only
    rows.append(jnp.concatenate([zero_slot] * kmax + [pad_slot(blk['wmp'][:, :, 0])],
                                axis=1))
    w_big = jnp.concatenate(rows, axis=0)                      # (C_out, K_pad)

    scale, shift = bn_fold(blk['gamma'], blk['beta'], blk['rmean'], blk['rvar'])
    w_big = w_big * scale[:, None]
    return (w_big.astype(jnp.bfloat16),
            shift.reshape(C_out, 1).astype(jnp.float32))


# ------------------------------ host wrapper --------------------------------

@partial(jax.jit, static_argnames=("kss", "nb_filters"))
def inception_block_pallas(x, params, kss, nb_filters):
    N, C_in, L = x.shape
    C_out = (len(kss) + 1) * nb_filters
    Pb = max(1, max((ks - 1) // 2 for ks in kss))
    kmax = 2 * Pb + 1
    C_pad = -(-C_in // 8) * 8                       # 8-sublane aligned tap slots
    K_pad = (kmax + 1) * C_pad

    w_big, shift = _build_fused_weights(params, kss, nb_filters, C_in, C_pad, Pb)

    # per-packed-lane VMEM footprint (f32 bytes): double-buffered in/out blocks
    # + masks + packed input + im2col views/stacked (f32 + bf16) + matmul out.
    bytes_per_lane = (4 * (2 * C_in + 2 * C_out + 2 * (kmax + 2) + C_pad + 2 * K_pad)
                      + 2 * K_pad + 8 * C_out)
    vmem_limit = _pick_vmem_limit()
    B_TILE = _choose_batch_tile(N, L, bytes_per_lane, int(vmem_limit * 0.6))

    N_pad = -(-N // B_TILE) * B_TILE
    if N_pad != N:
        x = jnp.pad(x, ((0, N_pad - N), (0, 0), (0, 0)))
    W = B_TILE * L

    masks = jnp.asarray(_build_masks_np(L, Pb, B_TILE))        # compile-time const

    out = pl.pallas_call(
        _make_inception_kernel(C_in, C_pad, Pb, L),
        out_shape=jax.ShapeDtypeStruct((N_pad, C_out, L), jnp.float32),
        grid=(N_pad // B_TILE,),
        in_specs=[
            pl.BlockSpec((B_TILE, C_in, L), lambda i: (i, 0, 0)),
            pl.BlockSpec((kmax + 2, W), lambda i: (0, 0)),     # grid-invariant
            pl.BlockSpec((C_out, K_pad), lambda i: (0, 0)),    # grid-invariant
            pl.BlockSpec((C_out, 1), lambda i: (0, 0)),        # grid-invariant
        ],
        out_specs=pl.BlockSpec((B_TILE, C_out, L), lambda i: (i, 0, 0)),
        compiler_params=pltpu.CompilerParams(
            dimension_semantics=("parallel",),
            vmem_limit_bytes=vmem_limit),
    )(x, masks, w_big, shift)

    return out[:N]


# -------------------- deterministic parameter init --------------------------

def init_block_params(key, in_channels, kss, bottleneck_size, nb_filters):
    C_out = (len(kss) + 1) * nb_filters
    bot = bottleneck_size if bottleneck_size > 0 else in_channels
    k = jax.random.split(key, 7 + len(kss))
    params = {
        'wb': (jax.random.normal(k[0], (bottleneck_size, in_channels, 1),
                                 jnp.float32) / np.sqrt(in_channels))
              if bottleneck_size > 0 else None,
        'wbr': [jax.random.normal(k[1 + i], (nb_filters, bot, ks), jnp.float32)
                / np.sqrt(bot * ks) for i, ks in enumerate(kss)],
        'wmp': jax.random.normal(k[1 + len(kss)], (nb_filters, in_channels, 1),
                                 jnp.float32) / np.sqrt(in_channels),
        'gamma': 1.0 + 0.1 * jax.random.normal(k[2 + len(kss)], (C_out,), jnp.float32),
        'beta': 0.1 * jax.random.normal(k[3 + len(kss)], (C_out,), jnp.float32),
        'rmean': 0.1 * jax.random.normal(k[4 + len(kss)], (C_out,), jnp.float32),
        'rvar': jax.random.uniform(k[5 + len(kss)], (C_out,), jnp.float32, 0.5, 1.5),
    }
    return params


# ---------------------- pure-JAX reference (for checking) -------------------

def conv1d_ref(x, w, pad):
    return lax.conv_general_dilated(
        x, w, window_strides=(1,), padding=[(pad, pad)],
        dimension_numbers=('NCH', 'OIH', 'NCH'),
        precision=lax.Precision.HIGHEST)


def maxpool3_ref(x):
    return lax.reduce_window(x, -jnp.inf, lax.max,
                             window_dimensions=(1, 1, 3),
                             window_strides=(1, 1, 1),
                             padding=[(0, 0), (0, 0), (1, 1)])


def inception_block_ref(x, blk, kss):
    bott = conv1d_ref(x, blk['wb'], 0) if blk['wb'] is not None else x
    outs = [conv1d_ref(bott, w, (ks - 1) // 2) for w, ks in zip(blk['wbr'], kss)]
    outs.append(conv1d_ref(maxpool3_ref(x), blk['wmp'], 0))
    y = jnp.concatenate(outs, axis=1)
    scale, shift = bn_fold(blk['gamma'], blk['beta'], blk['rmean'], blk['rvar'])
    return jnp.maximum(y * scale[None, :, None] + shift[None, :, None], 0.0)


# ----------------------------------- main ------------------------------------

if __name__ == "__main__":
    N, C, L = 2, 4, 128
    kss = (5, 3)
    nb_filters = 8
    bottleneck_size = 8

    key = jax.random.PRNGKey(0)
    kp, kx = jax.random.split(key)
    params = init_block_params(kp, C, kss, bottleneck_size, nb_filters)
    x = jax.random.normal(kx, (N, C, L), dtype=jnp.float32)

    y = inception_block_pallas(x, params, kss, nb_filters)
    y = jax.block_until_ready(y)

    y_ref = inception_block_ref(x, params, kss)
    assert y.shape == (N, (len(kss) + 1) * nb_filters, L), y.shape
    # Tolerance: MXU operands are bf16 (unit roundoff ~2e-3); each output is a
    # ~20-term dot of O(0.2) * O(1) values => expected max abs error ~1e-2.
    max_err = float(jnp.max(jnp.abs(y - y_ref)))
    assert max_err < 5e-2, f"mismatch vs reference: {max_err}"
    print("KERNEL_OK")
</pallas_src>

<mosaic_0001>
module attributes {stable_mosaic.version = 11 : i64} {
  func.func @kernel(%arg0: i32, %arg1: memref<2x4x128xf32, #tpu.memory_space<vmem>>, %arg2: memref<7x256xf32, #tpu.memory_space<vmem>>, %arg3: memref<24x48xbf16, #tpu.memory_space<vmem>>, %arg4: memref<24x1xf32, #tpu.memory_space<vmem>>, %arg5: memref<2x24x128xf32, #tpu.memory_space<vmem>>) attributes {dimension_semantics = [#tpu.dimension_semantics<parallel>], iteration_bounds = array<i64: 1>, scalar_prefetch = 0 : i64, scratch_operands = 0 : i64, tpu.core_type = #tpu.core_type<tc>, window_params = [{transform_indices = @transform_0, window_bounds = array<i64: 2, 4, 128>}, {pipeline_mode = #tpu.pipeline_mode<synchronous>, transform_indices = @transform_1, window_bounds = array<i64: 7, 256>}, {pipeline_mode = #tpu.pipeline_mode<synchronous>, transform_indices = @transform_2, window_bounds = array<i64: 24, 48>}, {pipeline_mode = #tpu.pipeline_mode<synchronous>, transform_indices = @transform_3, window_bounds = array<i64: 24, 1>}, {transform_indices = @transform_4, window_bounds = array<i64: 2, 24, 128>}]} {
    %c0 = arith.constant 0 : index
    %c0_0 = arith.constant 0 : index
    %c0_1 = arith.constant 0 : index
    %0 = vector.load %arg1[%c0, %c0_0, %c0_1] : memref<2x4x128xf32, #tpu.memory_space<vmem>>, vector<2x4x128xf32>
    %1 = vector.extract_strided_slice %0 {offsets = [0, 0, 0], sizes = [1, 4, 128], strides = [1, 1, 1]} : vector<2x4x128xf32> to vector<1x4x128xf32>
    %2 = vector.shape_cast %1 : vector<1x4x128xf32> to vector<4x128xf32>
    %3 = vector.extract_strided_slice %0 {offsets = [1, 0, 0], sizes = [1, 4, 128], strides = [1, 1, 1]} : vector<2x4x128xf32> to vector<1x4x128xf32>
    %4 = vector.shape_cast %3 : vector<1x4x128xf32> to vector<4x128xf32>
    %5 = tpu.concatenate %2, %4 in 1 : vector<4x128xf32>, vector<4x128xf32> -> vector<4x256xf32>
    %cst = arith.constant 0.000000e+00 : f32
    %6 = vector.broadcast %cst : f32 to vector<4x256xf32>
    %7 = tpu.concatenate %5, %6 in 0 : vector<4x256xf32>, vector<4x256xf32> -> vector<8x256xf32>
    %c0_2 = arith.constant 0 : index
    %c0_3 = arith.constant 0 : index
    %8 = vector.load %arg2[%c0_2, %c0_3] : memref<7x256xf32, #tpu.memory_space<vmem>>, vector<7x256xf32>
    %c2_i32 = arith.constant 2 : i32
    %9 = tpu.dynamic_rotate %7 by %c2_i32 dim 1 : vector<8x256xf32>, i32 -> vector<8x256xf32>
    %10 = vector.extract_strided_slice %8 {offsets = [0, 0], sizes = [1, 256], strides = [1, 1]} : vector<7x256xf32> to vector<1x256xf32>
    %11 = vector.broadcast %10 : vector<1x256xf32> to vector<8x256xf32>
    %12 = arith.mulf %9, %11 : vector<8x256xf32>
    %c1_i32 = arith.constant 1 : i32
    %13 = tpu.dynamic_rotate %7 by %c1_i32 dim 1 : vector<8x256xf32>, i32 -> vector<8x256xf32>
    %14 = vector.extract_strided_slice %8 {offsets = [1, 0], sizes = [1, 256], strides = [1, 1]} : vector<7x256xf32> to vector<1x256xf32>
    %15 = vector.broadcast %14 : vector<1x256xf32> to vector<8x256xf32>
    %16 = arith.mulf %13, %15 : vector<8x256xf32>
    %17 = vector.extract_strided_slice %8 {offsets = [5, 0], sizes = [1, 256], strides = [1, 1]} : vector<7x256xf32> to vector<1x256xf32>
    %18 = vector.broadcast %17 : vector<1x256xf32> to vector<8x256xf32>
    %19 = arith.addf %16, %18 : vector<8x256xf32>
    %c255_i32 = arith.constant 255 : i32
    %20 = tpu.dynamic_rotate %7 by %c255_i32 dim 1 : vector<8x256xf32>, i32 -> vector<8x256xf32>
    %21 = vector.extract_strided_slice %8 {offsets = [3, 0], sizes = [1, 256], strides = [1, 1]} : vector<7x256xf32> to vector<1x256xf32>
    %22 = vector.broadcast %21 : vector<1x256xf32> to vector<8x256xf32>
    %23 = arith.mulf %20, %22 : vector<8x256xf32>
    %24 = vector.extract_strided_slice %8 {offsets = [6, 0], sizes = [1, 256], strides = [1, 1]} : vector<7x256xf32> to vector<1x256xf32>
    %25 = vector.broadcast %24 : vector<1x256xf32> to vector<8x256xf32>
    %26 = arith.addf %23, %25 : vector<8x256xf32>
    %c254_i32 = arith.constant 254 : i32
    %27 = tpu.dynamic_rotate %7 by %c254_i32 dim 1 : vector<8x256xf32>, i32 -> vector<8x256xf32>
    %28 = vector.extract_strided_slice %8 {offsets = [4, 0], sizes = [1, 256], strides = [1, 1]} : vector<7x256xf32> to vector<1x256xf32>
    %29 = vector.broadcast %28 : vector<1x256xf32> to vector<8x256xf32>
    %30 = arith.mulf %27, %29 : vector<8x256xf32>
    %31 = arith.maximumf %19, %7 : vector<8x256xf32>
    %32 = arith.maximumf %31, %26 : vector<8x256xf32>
    %33 = tpu.concatenate %12, %16, %7, %23, %30, %32 in 0 : vector<8x256xf32>, vector<8x256xf32>, vector<8x256xf32>, vector<8x256xf32>, vector<8x256xf32>, vector<8x256xf32> -> vector<48x256xf32>
    %c0_4 = arith.constant 0 : index
    %c0_5 = arith.constant 0 : index
    %34 = vector.load %arg3[%c0_4, %c0_5] : memref<24x48xbf16, #tpu.memory_space<vmem>>, vector<24x48xbf16>
    %35 = arith.truncf %33 : vector<48x256xf32> to vector<48x256xbf16>
    %cst_6 = arith.constant dense<0.000000e+00> : vector<24x256xf32>
    %36 = tpu.matmul %34, %35, %cst_6 {dimension_numbers = #tpu.dot_dimension_numbers<[1], [0], [0], [1], [0, 0, 1, 1], [], []>} : vector<24x48xbf16>, vector<48x256xbf16>, vector<24x256xf32> -> vector<24x256xf32>
    %c0_7 = arith.constant 0 : index
    %c0_8 = arith.constant 0 : index
    %37 = vector.load %arg4[%c0_7, %c0_8] : memref<24x1xf32, #tpu.memory_space<vmem>>, vector<24x1xf32>
    %38 = vector.broadcast %37 : vector<24x1xf32> to vector<24x256xf32>
    %39 = arith.addf %36, %38 : vector<24x256xf32>
    %cst_9 = arith.constant 0.000000e+00 : f32
    %40 = vector.broadcast %cst_9 : f32 to vector<24x256xf32>
    %41 = arith.maximumf %39, %40 : vector<24x256xf32>
    %42 = vector.extract_strided_slice %41 {offsets = [0, 0], sizes = [24, 128], strides = [1, 1]} : vector<24x256xf32> to vector<24x128xf32>
    %c0_10 = arith.constant 0 : index
    %c0_11 = arith.constant 0 : index
    %c0_12 = arith.constant 0 : index
    %43 = vector.load %arg5[%c0_10, %c0_11, %c0_12] : memref<2x24x128xf32, #tpu.memory_space<vmem>>, vector<1x24x128xf32>
    %44 = vector.shape_cast %43 : vector<1x24x128xf32> to vector<24x128xf32>
    %45 = vector.shape_cast %42 : vector<24x128xf32> to vector<1x24x128xf32>
    tpu.vector_store %arg5[%c0_10, %c0_11, %c0_12], %45 {strides = array<i32>} : memref<2x24x128xf32, #tpu.memory_space<vmem>>, vector<1x24x128xf32>,
    %46 = vector.extract_strided_slice %41 {offsets = [0, 128], sizes = [24, 128], strides = [1, 1]} : vector<24x256xf32> to vector<24x128xf32>
    %c1 = arith.constant 1 : index
    %c0_13 = arith.constant 0 : index
    %c0_14 = arith.constant 0 : index
    %47 = vector.load %arg5[%c1, %c0_13, %c0_14] : memref<2x24x128xf32, #tpu.memory_space<vmem>>, vector<1x24x128xf32>
    %48 = vector.shape_cast %47 : vector<1x24x128xf32> to vector<24x128xf32>
    %49 = vector.shape_cast %46 : vector<24x128xf32> to vector<1x24x128xf32>
    tpu.vector_store %arg5[%c1, %c0_13, %c0_14], %49 {strides = array<i32>} : memref<2x24x128xf32, #tpu.memory_space<vmem>>, vector<1x24x128xf32>,
    return
  }
  func.func @transform_0(%arg0: i32) -> (i32, i32, i32) {
    %c0_i32 = arith.constant 0 : i32
    %c0_i32_0 = arith.constant 0 : i32
    %c0_i32_1 = arith.constant 0 : i32
    return %arg0, %c0_i32, %c0_i32_0 : i32, i32, i32
  }
  func.func @transform_1(%arg0: i32) -> (i32, i32) {
    %c0_i32 = arith.constant 0 : i32
    %c0_i32_0 = arith.constant 0 : i32
    %c0_i32_1 = arith.constant 0 : i32
    return %c0_i32, %c0_i32_0 : i32, i32
  }
  func.func @transform_2(%arg0: i32) -> (i32, i32) {
    %c0_i32 = arith.constant 0 : i32
    %c0_i32_0 = arith.constant 0 : i32
    %c0_i32_1 = arith.constant 0 : i32
    return %c0_i32, %c0_i32_0 : i32, i32
  }
  func.func @transform_3(%arg0: i32) -> (i32, i32) {
    %c0_i32 = arith.constant 0 : i32
    %c0_i32_0 = arith.constant 0 : i32
    %c0_i32_1 = arith.constant 0 : i32
    return %c0_i32, %c0_i32_0 : i32, i32
  }
  func.func @transform_4(%arg0: i32) -> (i32, i32, i32) {
    %c0_i32 = arith.constant 0 : i32
    %c0_i32_0 = arith.constant 0 : i32
    %c0_i32_1 = arith.constant 0 : i32
    return %arg0, %c0_i32, %c0_i32_0 : i32, i32, i32
  }
}

</mosaic_0001>

<llo_original>
// kernel: inception_block_pallas.1
$region0: #{inception_block_pallas.1}
  #allocation0 [shape = 'u32[]', space=smem, size = 0x4, offset = 0x4, fixed_abs, tag = 'smem constant byte address 0x4 - core index']
  #allocation1 [shape = 'u32[144,128]{1,0:T(1,128)}', space=vmem, size = 0x12000, scoped, tag = 'internal scratch']
  %s0 = inlined_call_operand.vmem [shape: f32[2,4,128], index: 0, kind: input, shape index: {}]
  %s1 = inlined_call_operand.vmem [shape: f32[7,256], index: 1, kind: input, shape index: {}]
  %s2 = inlined_call_operand.vmem [shape: bf16[24,48], index: 2, kind: input, shape index: {}]
  %s3 = inlined_call_operand.vmem [shape: f32[24,1], index: 3, kind: input, shape index: {}]
  %s4 = inlined_call_operand.hbm [shape: f32[2,24,128], index: 4, kind: output, shape index: {}]
  %s5 = sld [smem:[#allocation0]]
  $region26: #{inception_block_pallas.1} parent=0
    _
  %s7 = ssub.s32 1, %s5
  %s8 = scalar_select 0, %s7, %s5
  $region1: #{inception_block_pallas.1} parent=0
    #allocation2 [shape = 'u8[24576]{0}', space=vmem, size = 0x6000, scoped, tag = 'output window, operand 0, single buffered']
    #allocation3 [shape = 's32[1]{0}', space=sflag, size = 0x4, scoped, tag = 'scoped memory for inception_block_pallas.1']
    %9 = vsyncpa [#allocation3], 0
    // Predicated region
    $region2: #{inception_block_pallas.1} parent=1 // pred_check
      _
    $region3: #{inception_block_pallas.1} parent=1 // pred_check_branch
      %11 = sbr.rel (0) target = $region5
    $region4: #{inception_block_pallas.1} parent=1 // pred_region
      _
    $region5: #{inception_block_pallas.1} parent=1 // pred_fallthru
      _
    // Predicated region
    $region6: #{inception_block_pallas.1} parent=1 // pred_check
      _
    $region7: #{inception_block_pallas.1} parent=1 // pred_check_branch
      %13 = sbr.rel (0) target = $region9
    $region8: #{inception_block_pallas.1} parent=1 // pred_region
      _
    $region9: #{inception_block_pallas.1} parent=1 // pred_fallthru
      _
    // Predicated region
    $region10: #{inception_block_pallas.1} parent=1 // pred_check
      _
    $region11: #{inception_block_pallas.1} parent=1 // pred_check_branch
      %15 = sbr.rel (0) target = $region13
    $region12: #{inception_block_pallas.1} parent=1 // pred_region
      _
    $region13: #{inception_block_pallas.1} parent=1 // pred_fallthru
      _
    // Predicated region
    $region14: #{inception_block_pallas.1} parent=1 // pred_check
      _
    $region15: #{inception_block_pallas.1} parent=1 // pred_check_branch
      %17 = sbr.rel (0) target = $region17
    $region16: #{inception_block_pallas.1} parent=1 // pred_region
      _
    $region17: #{inception_block_pallas.1} parent=1 // pred_fallthru
      _
    %v19 = vld [vmem:[%s0] sm:$0xf]
    %v20 = vld [vmem:[%s0 + $0x4] sm:$0xf]
    %vm21 = vcmask 1043456
    %v22 = vsel %vm21, %v19, 0.0
    %v23 = vsel %vm21, %v20, 0.0
    %v24 = vld [vmem:[%s1] sm:$0x7f]
    %v25 = vld [vmem:[%s1 + $0x8] sm:$0x7f]
    %26 = vrot.lane.b32.xlu0 %v22, 2
    %v27 = vpop.permute.xlu0 %26
    %28 = vrot.lane.b32.xlu0 %v23, 2
    %v29 = vpop.permute.xlu0 %28
    %v30 = vlaneseq
    %v31 = vand.u32 %v30, 127
    %vm32 = vcmp.lt.s32.totalorder %v31, 2
    %v33 = vsel %vm32, %v27, %v29
    %v34 = vsel %vm32, %v29, %v27
    %v35 = vlaneseq
    %v36 = vshrl.u32 %v35, 7
    %v37 = vsub.s32 0, %v36
    %v38 = vrot.slane %v24, %v37
    %v39 = vlaneseq
    %v40 = vshrl.u32 %v39, 7
    %v41 = vsub.s32 0, %v40
    %v42 = vrot.slane %v25, %v41
    %v43 = vmul.f32 %v34, %v38
    %v44 = vmul.f32 %v33, %v42
    %45 = vrot.lane.b32.xlu0 %v22, 1
    %v46 = vpop.permute.xlu0 %45
    %47 = vrot.lane.b32.xlu0 %v23, 1
    %v48 = vpop.permute.xlu0 %47
    %vm49 = vcmp.lt.s32.totalorder %v31, 1
    %v50 = vsel %vm49, %v46, %v48
    %v51 = vsel %vm49, %v48, %v46
    %v52 = vlaneseq
    %v53 = vshrl.u32 %v52, 7
    %v54 = vsub.s32 1, %v53
    %v55 = vrot.slane %v24, %v54
    %v56 = vlaneseq
    %v57 = vshrl.u32 %v56, 7
    %v58 = vsub.s32 1, %v57
    %v59 = vrot.slane %v25, %v58
    %v60 = vmul.f32 %v51, %v55
    %v61 = vmul.f32 %v50, %v59
    %v62 = vlaneseq
    %v63 = vshrl.u32 %v62, 7
    %v64 = vsub.s32 5, %v63
    %v65 = vrot.slane %v24, %v64
    %v66 = vlaneseq
    %v67 = vshrl.u32 %v66, 7
    %v68 = vsub.s32 5, %v67
    %v69 = vrot.slane %v25, %v68
    %v70 = vadd.f32 %v60, %v65
    %v71 = vadd.f32 %v61, %v69
    %72 = vrot.lane.b32.xlu0 %v22, 127
    %v73 = vpop.permute.xlu0 %72
    %74 = vrot.lane.b32.xlu0 %v23, 127
    %v75 = vpop.permute.xlu0 %74
    %vm76 = vcmp.lt.s32.totalorder %v31, 127
    %v77 = vsel %vm76, %v73, %v75
    %v78 = vsel %vm76, %v75, %v73
    %v79 = vlaneseq
    %v80 = vshrl.u32 %v79, 7
    %v81 = vsub.s32 3, %v80
    %v82 = vrot.slane %v24, %v81
    %v83 = vlaneseq
    %v84 = vshrl.u32 %v83, 7
    %v85 = vsub.s32 3, %v84
    %v86 = vrot.slane %v25, %v85
    %v87 = vmul.f32 %v77, %v82
    %v88 = vmul.f32 %v78, %v86
    %v89 = vlaneseq
    %v90 = vshrl.u32 %v89, 7
    %v91 = vsub.s32 6, %v90
    %v92 = vrot.slane %v24, %v91
    %v93 = vlaneseq
    %v94 = vshrl.u32 %v93, 7
    %v95 = vsub.s32 6, %v94
    %v96 = vrot.slane %v25, %v95
    %v97 = vadd.f32 %v87, %v92
    %v98 = vadd.f32 %v88, %v96
    %99 = vrot.lane.b32.xlu0 %v22, 126
    %v100 = vpop.permute.xlu0 %99
    %101 = vrot.lane.b32.xlu0 %v23, 126
    %v102 = vpop.permute.xlu0 %101
    %vm103 = vcmp.lt.s32.totalorder %v31, 126
    %v104 = vsel %vm103, %v100, %v102
    %v105 = vsel %vm103, %v102, %v100
    %v106 = vlaneseq
    %v107 = vshrl.u32 %v106, 7
    %v108 = vsub.s32 4, %v107
    %v109 = vrot.slane %v24, %v108
    %v110 = vlaneseq
    %v111 = vshrl.u32 %v110, 7
    %v112 = vsub.s32 4, %v111
    %v113 = vrot.slane %v25, %v112
    %v114 = vmul.f32 %v104, %v109
    %v115 = vmul.f32 %v105, %v113
    %v116 = vmax.f32 %v70, %v22
    %v117 = vmax.f32 %v71, %v23
    %v118 = vmax.f32 %v116, %v97
    %v119 = vmax.f32 %v117, %v98
    %v120 = vld [vmem:[%s2] sm:$0xf]
    %v121 = vld [vmem:[%s2 + $0x4] sm:$0xf]
    %v122 = vld [vmem:[%s2 + $0x8] sm:$0xf]
    %v123 = vpack.c.bf16 %v60, %v43
    %v124 = vpack.c.bf16 %v61, %v44
    %v125 = vpack.c.bf16 %v87, %v22
    %v126 = vpack.c.bf16 %v88, %v23
    %v127 = vpack.c.bf16 %v118, %v114
    %v128 = vpack.c.bf16 %v119, %v115
    %v129 = vld [vmem:[%s3] sm:$0xff]
    %v130 = vld [vmem:[%s3 + $0x8] sm:$0xff]
    %v131 = vld [vmem:[%s3 + $0x10] sm:$0xff]
    %133 = vset.pattern.permute.xlu0 0
    %134 = vperm.xlu0 %133, %v129
    %v135 = vpop.permute.xlu0 %134
    %138 = vset.pattern.permute.xlu0 0
    %139 = vperm.xlu0 %138, %v130
    %v140 = vpop.permute.xlu0 %139
    %143 = vset.pattern.permute.xlu0 0
    %144 = vperm.xlu0 %143, %v131
    %v145 = vpop.permute.xlu0 %144
    %v150 = vunpack.c.l.b16 %v120
    %v151 = vunpack.c.l.b16 %v121
    %v152 = vunpack.c.l.b16 %v122
    %v153 = vpack.c.b16 %v151, %v150
    %v154 = vpack.c.b16 %v152, %v152
    %vm155 = vcmask 392192
    %v157 = vsel %vm155, %v153, 0
    %v160 = vsel %vm155, %v154, 0
    %162 = vmatprep.subr.bf16.mxu0 %v124
    %163 = vmatpush1.bf16.msra.mxu0 %v123
    %164 = vmatprep.subr.bf16.mxu0 %v126
    %165 = vmatpush1.bf16.msra.mxu0 %v125
    %166 = vmatprep.subr.bf16.mxu0 %v128
    %167 = vmatpush1.bf16.msra.mxu0 %v127
    %168 = vmatprep.subr.bf16.mxu0 0
    %169 = vmatpush1.bf16.msra.mxu0 0
    %170 = vmatprep.subr.bf16.mxu0 0
    %171 = vmatpush1.bf16.msra.mxu0 0
    %172 = vmatprep.subr.bf16.mxu0 0
    %173 = vmatpush1.bf16.msra.mxu0 0
    %174 = vmatprep.subr.bf16.mxu0 0
    %175 = vmatpush1.bf16.msra.mxu0 0
    %176 = vmatprep.subr.bf16.mxu0 0
    %177 = vmatpush1.bf16.msra.mxu0 0
    %178 = vmatprep.subr.bf16.mxu0 0
    %179 = vmatpush1.bf16.msra.mxu0 0
    %180 = vmatprep.subr.bf16.mxu0 0
    %181 = vmatpush1.bf16.msra.mxu0 0
    %182 = vmatprep.subr.bf16.mxu0 0
    %183 = vmatpush1.bf16.msra.mxu0 0
    %184 = vmatprep.subr.bf16.mxu0 0
    %185 = vmatpush1.bf16.msra.mxu0 0
    %186 = vmatprep.subr.bf16.mxu0 0
    %187 = vmatpush1.bf16.msra.mxu0 0
    %188 = vmatprep.subr.bf16.mxu0 0
    %189 = vmatpush1.bf16.msra.mxu0 0
    %190 = vmatprep.subr.bf16.mxu0 0
    %191 = vmatpush1.bf16.msra.mxu0 0
    %192 = vmatprep.subr.bf16.mxu0 0
    %193 = vmatpush1.bf16.msra.mxu0 0
    %194 = vmatprep.mubr.bf16.mxu0 0
    %195 = vmatmul.mubr.bf16.gmra.mrb[0].mxu0 %v157
    %v196 = vpop.f32.mrb[0].mxu0
    %v197 = vadd.f32 %v135, %v196
    %v198 = vpop.f32.mrb[0].mxu0
    %v199 = vadd.f32 %v135, %v198
    %v200 = vpop.f32.mrb[0].mxu0
    %v201 = vadd.f32 %v140, %v200
    %v202 = vpop.f32.mrb[0].mxu0
    %v203 = vadd.f32 %v140, %v202
    %204 = vmatprep.mubr.bf16.mxu0 0
    %205 = vmatmul.mubr.bf16.gmra.mrb[0].mxu0 %v160
    %v206 = vpop.f32.mrb[0].mxu0
    %v207 = vadd.f32 %v145, %v206
    %v208 = vpop.f32.mrb[0].mxu0
    %v209 = vadd.f32 %v145, %v208
    %v210 = vpop.f32.mrb[0].mxu0
    %v211 = vpop.f32.mrb[0].mxu0
    %212 = vdwg.mxu0
    %v213 = vmax.f32 %v197, 0.0
    %v214 = vmax.f32 %v199, 0.0
    %v215 = vmax.f32 %v201, 0.0
    %v216 = vmax.f32 %v203, 0.0
    %v217 = vmax.f32 %v207, 0.0
    %v218 = vmax.f32 %v209, 0.0
    %219 = vst [vmem:[#allocation2] sm:$0xff] %v213
    %220 = vst [vmem:[#allocation2 + $0x8] sm:$0xff] %v215
    %221 = vst [vmem:[#allocation2 + $0x10] sm:$0xff] %v217
    %s222 = scalar_lea.vmem [#allocation2], 24
    %223 = vst [vmem:[%s222] sm:$0xff] %v214
    %224 = vst [vmem:[%s222 + $0x8] sm:$0xff] %v216
    %225 = vst [vmem:[%s222 + $0x10] sm:$0xff] %v218
    // Predicated region
    $region18: #{inception_block_pallas.1} parent=1 // pred_check
      _
    $region19: #{inception_block_pallas.1} parent=1 // pred_check_branch
      %227 = sbr.rel (0) target = $region21
    $region20: #{inception_block_pallas.1} parent=1 // pred_region
      %s229 = ssub.s32 768, 768
      %230 = vsyncadd [#allocation3], %s229
      %s231 = sshll.u32 [#allocation2], 4
      %s232 = int_to_ptr.vmem [resolvable:$true] %s231
      %237 = dma.vmem_to_hbm [thread:$0]  %s232, 768, %s4, [#allocation3], 128, 128, 8
    $region21: #{inception_block_pallas.1} parent=1 // pred_fallthru
      _
    // Predicated region
    $region22: #{inception_block_pallas.1} parent=1 // pred_check
      _
    $region23: #{inception_block_pallas.1} parent=1 // pred_check_branch
      %239 = sbr.rel (0) target = $region25
    $region24: #{inception_block_pallas.1} parent=1 // pred_region
      %240 = dma.done [#allocation3], 768
    $region25: #{inception_block_pallas.1} parent=1 // pred_fallthru
      _
    %241 = vsyncpa [#allocation3], 1

</llo_original>
